<compile_context>
chip_gen: v6e
topology: v6e:2x2x1
jax: 0.10.0
libtpu: 0.0.40
codegen_flags: <defaults>
</compile_context>

<pallas_src>
import functools

import jax
import jax.numpy as jnp
from jax.experimental import pallas as pl
from jax.experimental.pallas import tpu as pltpu

HIDDEN = 256
LANE = 128


def _round_up(x, m):
    return (x + m - 1) // m * m


def ddpg_actor_kernel(x_ref, w1_ref, b1_ref, w2_ref, b2_ref, w3_ref, b3_ref,
                      o_ref, *, max_action):
    # Layer 1: Linear + ReLU (bf16 operands on the MXU, f32 accumulation).
    x = x_ref[...].astype(jnp.bfloat16)
    h1 = jnp.dot(x, w1_ref[...], preferred_element_type=jnp.float32)
    h1 = jnp.maximum(h1 + b1_ref[...], 0.0)
    # Layer 2: Linear + ReLU.
    h2 = jnp.dot(h1.astype(jnp.bfloat16), w2_ref[...],
                 preferred_element_type=jnp.float32)
    h2 = jnp.maximum(h2 + b2_ref[...], 0.0)
    # Layer 3: Linear + sigmoid, scaled by max_action.
    z = jnp.dot(h2.astype(jnp.bfloat16), w3_ref[...],
                preferred_element_type=jnp.float32)
    z = z + b3_ref[...]
    o_ref[...] = (jax.nn.sigmoid(z) * max_action).astype(o_ref.dtype)


def prep_params(params):
    """One-time weight prep (call once, reuse every forward): bf16 weights,
    f32 (1, N) biases, lane-dense (128-multiple) layer-3 output width."""
    w1, b1, w2, b2, w3, b3 = (params[k] for k in
                              ("w1", "b1", "w2", "b2", "w3", "b3"))
    action_dim = w3.shape[1]
    Ap = _round_up(max(action_dim, LANE), LANE)
    w3_p = jnp.zeros((HIDDEN, Ap), jnp.float32).at[:, :action_dim].set(w3)
    b3_p = jnp.zeros((1, Ap), jnp.float32).at[:, :action_dim].set(b3.reshape(1, -1))
    return dict(
        w1=w1.astype(jnp.bfloat16),
        b1=b1.reshape(1, HIDDEN).astype(jnp.float32),
        w2=w2.astype(jnp.bfloat16),
        b2=b2.reshape(1, HIDDEN).astype(jnp.float32),
        w3=w3_p.astype(jnp.bfloat16),
        b3=b3_p,
    )


def _choose_tile_b(B):
    # >= 8 rows (sublane); 256-row tiles at large batch fill the v6e/v7x MXU
    # and amortize per-grid-step overhead (128 already saturates v5e).
    if B <= 256:
        return _round_up(max(B, 8), 8)
    return 256


def _forward(s, p, *, max_action, action_dim):
    B, state_dim = s.shape
    Ap = p["w3"].shape[1]

    tile_b = _choose_tile_b(B)
    Bp = _round_up(B, tile_b)
    if Bp != B:
        # Only the remainder batch tile is padded; feature dims stay unpadded.
        s = jnp.pad(s, ((0, Bp - B), (0, 0)))
    grid = (Bp // tile_b,)

    kernel = functools.partial(ddpg_actor_kernel, max_action=float(max_action))

    # VMEM: ~0.2 MiB resident bf16 weights + double-buffered activation tiles,
    # far below the 32 MiB request (headroom-safe on v7x's 64 MiB/TC).
    out_p = pl.pallas_call(
        kernel,
        out_shape=jax.ShapeDtypeStruct((Bp, Ap), jnp.float32),
        grid=grid,
        in_specs=[
            pl.BlockSpec((tile_b, state_dim), lambda i: (i, 0)),  # x tile
            pl.BlockSpec((state_dim, HIDDEN), lambda i: (0, 0)),  # w1 (resident)
            pl.BlockSpec((1, HIDDEN), lambda i: (0, 0)),          # b1
            pl.BlockSpec((HIDDEN, HIDDEN), lambda i: (0, 0)),     # w2
            pl.BlockSpec((1, HIDDEN), lambda i: (0, 0)),          # b2
            pl.BlockSpec((HIDDEN, Ap), lambda i: (0, 0)),         # w3
            pl.BlockSpec((1, Ap), lambda i: (0, 0)),              # b3
        ],
        out_specs=pl.BlockSpec((tile_b, Ap), lambda i: (i, 0)),
        compiler_params=pltpu.CompilerParams(
            dimension_semantics=("parallel",),
            vmem_limit_bytes=32 << 20,
        ),
    )(s, p["w1"], p["b1"], p["w2"], p["b2"], p["w3"], p["b3"])

    return out_p[:B, :action_dim]


# jit fuses the (rare) batch pad, the Pallas custom call and the output slice
# into a single executable; max_action / action_dim are static.
ddpg_actor_forward = jax.jit(_forward, static_argnames=("max_action", "action_dim"))


def init_params(key, state_dim, action_dim):
    """Deterministic init mimicking nn.Linear's U(-1/sqrt(fan_in), 1/sqrt(fan_in))."""
    ks = jax.random.split(key, 6)

    def linear(kw, kb, fan_in, fan_out):
        bound = 1.0 / jnp.sqrt(float(fan_in))
        w = jax.random.uniform(kw, (fan_in, fan_out), jnp.float32, -bound, bound)
        b = jax.random.uniform(kb, (fan_out,), jnp.float32, -bound, bound)
        return w, b

    w1, b1 = linear(ks[0], ks[1], state_dim, HIDDEN)
    w2, b2 = linear(ks[2], ks[3], HIDDEN, HIDDEN)
    w3, b3 = linear(ks[4], ks[5], HIDDEN, action_dim)
    return dict(w1=w1, b1=b1, w2=w2, b2=b2, w3=w3, b3=b3)


def reference_forward(s, params, max_action):
    h1 = jnp.maximum(s @ params["w1"] + params["b1"], 0.0)
    h2 = jnp.maximum(h1 @ params["w2"] + params["b2"], 0.0)
    return jax.nn.sigmoid(h2 @ params["w3"] + params["b3"]) * max_action


if __name__ == "__main__":
    key = jax.random.PRNGKey(0)
    state_dim, action_dim, max_action = 16, 4, 2.0
    batch = 2

    k_params, k_x = jax.random.split(key)
    params = init_params(k_params, state_dim, action_dim)
    prepped = prep_params(params)          # one-time weight prep (bf16 + pad)
    s = jax.random.normal(k_x, (batch, state_dim), jnp.float32)

    out = ddpg_actor_forward(s, prepped, max_action=max_action,
                             action_dim=action_dim)
    out = jax.block_until_ready(out)

    ref = reference_forward(s, params, max_action)   # f32 reference
    assert out.shape == (batch, action_dim)
    # bf16 weights in the kernel vs f32 reference -> relaxed tolerance.
    assert jnp.allclose(out, ref, atol=2e-2, rtol=2e-2), (
        float(jnp.max(jnp.abs(out - ref))))

    print("KERNEL_OK")
</pallas_src>

<mosaic_0001>
module attributes {stable_mosaic.version = 11 : i64} {
  func.func @ddpg_actor_kernel(%arg0: i32, %arg1: memref<8x16xf32, #tpu.memory_space<vmem>>, %arg2: memref<16x256xbf16, #tpu.memory_space<vmem>>, %arg3: memref<1x256xf32, #tpu.memory_space<vmem>>, %arg4: memref<256x256xbf16, #tpu.memory_space<vmem>>, %arg5: memref<1x256xf32, #tpu.memory_space<vmem>>, %arg6: memref<256x128xbf16, #tpu.memory_space<vmem>>, %arg7: memref<1x128xf32, #tpu.memory_space<vmem>>, %arg8: memref<8x128xf32, #tpu.memory_space<vmem>>) attributes {dimension_semantics = [#tpu.dimension_semantics<parallel>], iteration_bounds = array<i64: 1>, scalar_prefetch = 0 : i64, scratch_operands = 0 : i64, tpu.core_type = #tpu.core_type<tc>, window_params = [{transform_indices = @transform_0, window_bounds = array<i64: 8, 16>}, {pipeline_mode = #tpu.pipeline_mode<synchronous>, transform_indices = @transform_1, window_bounds = array<i64: 16, 256>}, {pipeline_mode = #tpu.pipeline_mode<synchronous>, transform_indices = @transform_2, window_bounds = array<i64: 1, 256>}, {pipeline_mode = #tpu.pipeline_mode<synchronous>, transform_indices = @transform_3, window_bounds = array<i64: 256, 256>}, {pipeline_mode = #tpu.pipeline_mode<synchronous>, transform_indices = @transform_4, window_bounds = array<i64: 1, 256>}, {pipeline_mode = #tpu.pipeline_mode<synchronous>, transform_indices = @transform_5, window_bounds = array<i64: 256, 128>}, {pipeline_mode = #tpu.pipeline_mode<synchronous>, transform_indices = @transform_6, window_bounds = array<i64: 1, 128>}, {transform_indices = @transform_7, window_bounds = array<i64: 8, 128>}]} {
    %c0 = arith.constant 0 : index
    %c0_0 = arith.constant 0 : index
    %0 = vector.load %arg1[%c0, %c0_0] : memref<8x16xf32, #tpu.memory_space<vmem>>, vector<8x16xf32>
    %1 = arith.truncf %0 : vector<8x16xf32> to vector<8x16xbf16>
    %c0_1 = arith.constant 0 : index
    %c0_2 = arith.constant 0 : index
    %2 = vector.load %arg2[%c0_1, %c0_2] : memref<16x256xbf16, #tpu.memory_space<vmem>>, vector<16x256xbf16>
    %cst = arith.constant dense<0.000000e+00> : vector<8x256xf32>
    %3 = tpu.matmul %1, %2, %cst {dimension_numbers = #tpu.dot_dimension_numbers<[1], [0], [0], [1], [0, 0, 1, 1], [], []>} : vector<8x16xbf16>, vector<16x256xbf16>, vector<8x256xf32> -> vector<8x256xf32>
    %c0_3 = arith.constant 0 : index
    %c0_4 = arith.constant 0 : index
    %4 = vector.load %arg3[%c0_3, %c0_4] : memref<1x256xf32, #tpu.memory_space<vmem>>, vector<1x256xf32>
    %5 = vector.broadcast %4 : vector<1x256xf32> to vector<8x256xf32>
    %6 = arith.addf %3, %5 : vector<8x256xf32>
    %cst_5 = arith.constant 0.000000e+00 : f32
    %7 = vector.broadcast %cst_5 : f32 to vector<8x256xf32>
    %8 = arith.maximumf %6, %7 : vector<8x256xf32>
    %9 = arith.truncf %8 : vector<8x256xf32> to vector<8x256xbf16>
    %c0_6 = arith.constant 0 : index
    %c0_7 = arith.constant 0 : index
    %10 = vector.load %arg4[%c0_6, %c0_7] : memref<256x256xbf16, #tpu.memory_space<vmem>>, vector<256x256xbf16>
    %cst_8 = arith.constant dense<0.000000e+00> : vector<8x256xf32>
    %11 = tpu.matmul %9, %10, %cst_8 {dimension_numbers = #tpu.dot_dimension_numbers<[1], [0], [0], [1], [0, 0, 1, 1], [], []>} : vector<8x256xbf16>, vector<256x256xbf16>, vector<8x256xf32> -> vector<8x256xf32>
    %c0_9 = arith.constant 0 : index
    %c0_10 = arith.constant 0 : index
    %12 = vector.load %arg5[%c0_9, %c0_10] : memref<1x256xf32, #tpu.memory_space<vmem>>, vector<1x256xf32>
    %13 = vector.broadcast %12 : vector<1x256xf32> to vector<8x256xf32>
    %14 = arith.addf %11, %13 : vector<8x256xf32>
    %cst_11 = arith.constant 0.000000e+00 : f32
    %15 = vector.broadcast %cst_11 : f32 to vector<8x256xf32>
    %16 = arith.maximumf %14, %15 : vector<8x256xf32>
    %17 = arith.truncf %16 : vector<8x256xf32> to vector<8x256xbf16>
    %c0_12 = arith.constant 0 : index
    %c0_13 = arith.constant 0 : index
    %18 = vector.load %arg6[%c0_12, %c0_13] : memref<256x128xbf16, #tpu.memory_space<vmem>>, vector<256x128xbf16>
    %cst_14 = arith.constant dense<0.000000e+00> : vector<8x128xf32>
    %19 = tpu.matmul %17, %18, %cst_14 {dimension_numbers = #tpu.dot_dimension_numbers<[1], [0], [0], [1], [0, 0, 1, 1], [], []>} : vector<8x256xbf16>, vector<256x128xbf16>, vector<8x128xf32> -> vector<8x128xf32>
    %c0_15 = arith.constant 0 : index
    %c0_16 = arith.constant 0 : index
    %20 = vector.load %arg7[%c0_15, %c0_16] : memref<1x128xf32, #tpu.memory_space<vmem>>, vector<1x128xf32>
    %21 = vector.broadcast %20 : vector<1x128xf32> to vector<8x128xf32>
    %22 = arith.addf %19, %21 : vector<8x128xf32>
    %23 = arith.negf %22 : vector<8x128xf32>
    %24 = math.exp %23 : vector<8x128xf32>
    %cst_17 = arith.constant 1.000000e+00 : f32
    %25 = vector.broadcast %cst_17 : f32 to vector<8x128xf32>
    %26 = arith.addf %25, %24 : vector<8x128xf32>
    %27 = arith.divf %25, %26 : vector<8x128xf32>
    %cst_18 = arith.constant 2.000000e+00 : f32
    %28 = vector.broadcast %cst_18 : f32 to vector<8x128xf32>
    %29 = arith.mulf %27, %28 : vector<8x128xf32>
    %c0_19 = arith.constant 0 : index
    %c0_20 = arith.constant 0 : index
    %30 = vector.load %arg8[%c0_19, %c0_20] : memref<8x128xf32, #tpu.memory_space<vmem>>, vector<8x128xf32>
    tpu.vector_store %arg8[%c0_19, %c0_20], %29 {strides = array<i32>} : memref<8x128xf32, #tpu.memory_space<vmem>>, vector<8x128xf32>,
    return
  }
  func.func @transform_0(%arg0: i32) -> (i32, i32) {
    %c0_i32 = arith.constant 0 : i32
    %c0_i32_0 = arith.constant 0 : i32
    return %arg0, %c0_i32 : i32, i32
  }
  func.func @transform_1(%arg0: i32) -> (i32, i32) {
    %c0_i32 = arith.constant 0 : i32
    %c0_i32_0 = arith.constant 0 : i32
    %c0_i32_1 = arith.constant 0 : i32
    return %c0_i32, %c0_i32_0 : i32, i32
  }
  func.func @transform_2(%arg0: i32) -> (i32, i32) {
    %c0_i32 = arith.constant 0 : i32
    %c0_i32_0 = arith.constant 0 : i32
    %c0_i32_1 = arith.constant 0 : i32
    return %c0_i32, %c0_i32_0 : i32, i32
  }
  func.func @transform_3(%arg0: i32) -> (i32, i32) {
    %c0_i32 = arith.constant 0 : i32
    %c0_i32_0 = arith.constant 0 : i32
    %c0_i32_1 = arith.constant 0 : i32
    return %c0_i32, %c0_i32_0 : i32, i32
  }
  func.func @transform_4(%arg0: i32) -> (i32, i32) {
    %c0_i32 = arith.constant 0 : i32
    %c0_i32_0 = arith.constant 0 : i32
    %c0_i32_1 = arith.constant 0 : i32
    return %c0_i32, %c0_i32_0 : i32, i32
  }
  func.func @transform_5(%arg0: i32) -> (i32, i32) {
    %c0_i32 = arith.constant 0 : i32
    %c0_i32_0 = arith.constant 0 : i32
    %c0_i32_1 = arith.constant 0 : i32
    return %c0_i32, %c0_i32_0 : i32, i32
  }
  func.func @transform_6(%arg0: i32) -> (i32, i32) {
    %c0_i32 = arith.constant 0 : i32
    %c0_i32_0 = arith.constant 0 : i32
    %c0_i32_1 = arith.constant 0 : i32
    return %c0_i32, %c0_i32_0 : i32, i32
  }
  func.func @transform_7(%arg0: i32) -> (i32, i32) {
    %c0_i32 = arith.constant 0 : i32
    %c0_i32_0 = arith.constant 0 : i32
    return %arg0, %c0_i32 : i32, i32
  }
}

</mosaic_0001>

<llo_original>
// kernel: _forward.1
$region0: #{_forward.1}
  #allocation0 [shape = 'u32[]', space=smem, size = 0x4, offset = 0x4, fixed_abs, tag = 'smem constant byte address 0x4 - core index']
  #allocation1 [shape = 'u32[144,128]{1,0:T(1,128)}', space=vmem, size = 0x12000, scoped, tag = 'internal scratch']
  %s0 = inlined_call_operand.vmem [shape: f32[8,16], index: 0, kind: input, shape index: {}]
  %s1 = inlined_call_operand.vmem [shape: bf16[16,256], index: 1, kind: input, shape index: {}]
  %s2 = inlined_call_operand.vmem [shape: f32[1,256], index: 2, kind: input, shape index: {}]
  %s3 = inlined_call_operand.hbm [shape: bf16[256,256], index: 3, kind: input, shape index: {}]
  %s4 = inlined_call_operand.hbm [shape: f32[1,256], index: 4, kind: input, shape index: {}]
  %s5 = inlined_call_operand.hbm [shape: bf16[256,128], index: 5, kind: input, shape index: {}]
  %s6 = inlined_call_operand.hbm [shape: f32[1,128], index: 6, kind: input, shape index: {}]
  %s7 = inlined_call_operand.vmem [shape: f32[8,128], index: 7, kind: output, shape index: {}]
  %s8 = sld [smem:[#allocation0]]
  $region54: #{_forward.1} parent=0
    _
  %s10 = ssub.s32 1, %s8
  %s11 = scalar_select 0, %s10, %s8
  $region1: #{_forward.1} parent=0
    #allocation2 [shape = 'u8[131072]{0}', space=vmem, size = 0x20000, scoped, tag = 'input window, operand 3, single buffered']
    #allocation3 [shape = 's32[1]{0}', space=sflag, size = 0x4, scoped, tag = 'scoped memory for _forward.1']
    #allocation4 [shape = 'u8[1024]{0}', space=vmem, size = 0x400, scoped, tag = 'input window, operand 4, single buffered']
    #allocation5 [shape = 's32[1]{0}', space=sflag, size = 0x4, scoped, tag = 'scoped memory for _forward.1']
    #allocation6 [shape = 'u8[65536]{0}', space=vmem, size = 0x10000, scoped, tag = 'input window, operand 5, single buffered']
    #allocation7 [shape = 'u8[512]{0}', space=vmem, size = 0x400, scoped, tag = 'input window, operand 6, single buffered']
    #allocation8 [shape = 's32[1]{0}', space=sflag, size = 0x4, scoped, tag = 'scoped memory for _forward.1']
    %12 = vsyncpa [#allocation3], 0
    %13 = vsyncpa [#allocation5], 0
    %14 = vsyncpa [#allocation8], 0
    // Predicated region
    $region2: #{_forward.1} parent=1 // pred_check
      _
    $region3: #{_forward.1} parent=1 // pred_check_branch
      %16 = sbr.rel (0) target = $region5
    $region4: #{_forward.1} parent=1 // pred_region
      _
    $region5: #{_forward.1} parent=1 // pred_fallthru
      _
    // Predicated region
    $region6: #{_forward.1} parent=1 // pred_check
      _
    $region7: #{_forward.1} parent=1 // pred_check_branch
      %18 = sbr.rel (0) target = $region9
    $region8: #{_forward.1} parent=1 // pred_region
      _
    $region9: #{_forward.1} parent=1 // pred_fallthru
      _
    // Predicated region
    $region10: #{_forward.1} parent=1 // pred_check
      _
    $region11: #{_forward.1} parent=1 // pred_check_branch
      %20 = sbr.rel (0) target = $region13
    $region12: #{_forward.1} parent=1 // pred_region
      _
    $region13: #{_forward.1} parent=1 // pred_fallthru
      _
    // Predicated region
    $region14: #{_forward.1} parent=1 // pred_check
      _
    $region15: #{_forward.1} parent=1 // pred_check_branch
      %22 = sbr.rel (0) target = $region17
    $region16: #{_forward.1} parent=1 // pred_region
      %s24 = ssub.s32 4096, 4096
      %25 = vsyncadd [#allocation3], %s24
      %s26 = sshll.u32 [#allocation2], 4
      %s27 = int_to_ptr.vmem [resolvable:$true] %s26
      %32 = dma.hbm_to_vmem [thread:$0]  %s3, 4096, %s27, [#allocation3], 128, 128, 8
    $region17: #{_forward.1} parent=1 // pred_fallthru
      _
    // Predicated region
    $region18: #{_forward.1} parent=1 // pred_check
      _
    $region19: #{_forward.1} parent=1 // pred_check_branch
      %34 = sbr.rel (0) target = $region21
    $region20: #{_forward.1} parent=1 // pred_region
      %s36 = ssub.s32 32, 32
      %37 = vsyncadd [#allocation5], %s36
      %s39 = sshll.u32 [#allocation4], 4
      %s40 = int_to_ptr.vmem [resolvable:$true] %s39
      %42 = dma.hbm_to_vmem [thread:$0]  %s4, 32, %s40, [#allocation5]
    $region21: #{_forward.1} parent=1 // pred_fallthru
      _
    // Predicated region
    $region22: #{_forward.1} parent=1 // pred_check
      _
    $region23: #{_forward.1} parent=1 // pred_check_branch
      %44 = sbr.rel (0) target = $region25
    $region24: #{_forward.1} parent=1 // pred_region
      %s46 = ssub.s32 2048, 2048
      %47 = vsyncadd [#allocation5], %s46
      %s48 = sshll.u32 [#allocation6], 4
      %s49 = int_to_ptr.vmem [resolvable:$true] %s48
      %54 = dma.hbm_to_vmem [thread:$0]  %s5, 2048, %s49, [#allocation5], 64, 64, 4
    $region25: #{_forward.1} parent=1 // pred_fallthru
      _
    // Predicated region
    $region26: #{_forward.1} parent=1 // pred_check
      _
    $region27: #{_forward.1} parent=1 // pred_check_branch
      %56 = sbr.rel (0) target = $region29
    $region28: #{_forward.1} parent=1 // pred_region
      %s58 = ssub.s32 16, 16
      %59 = vsyncadd [#allocation8], %s58
      %s61 = sshll.u32 [#allocation7], 4
      %s62 = int_to_ptr.vmem [resolvable:$true] %s61
      %64 = dma.hbm_to_vmem [thread:$0]  %s6, 16, %s62, [#allocation8]
    $region29: #{_forward.1} parent=1 // pred_fallthru
      _
    // Predicated region
    $region30: #{_forward.1} parent=1 // pred_check
      _
    $region31: #{_forward.1} parent=1 // pred_check_branch
      %66 = sbr.rel (0) target = $region33
    $region32: #{_forward.1} parent=1 // pred_region
      %67 = dma.done [#allocation3], 4096
    $region33: #{_forward.1} parent=1 // pred_fallthru
      _
    // Predicated region
    $region34: #{_forward.1} parent=1 // pred_check
      _
    $region35: #{_forward.1} parent=1 // pred_check_branch
      %69 = sbr.rel (0) target = $region37
    $region36: #{_forward.1} parent=1 // pred_region
      %70 = dma.done [#allocation5], 32
    $region37: #{_forward.1} parent=1 // pred_fallthru
      _
    // Predicated region
    $region38: #{_forward.1} parent=1 // pred_check
      _
    $region39: #{_forward.1} parent=1 // pred_check_branch
      %72 = sbr.rel (0) target = $region41
    $region40: #{_forward.1} parent=1 // pred_region
      %73 = dma.done [#allocation5], 2048
    $region41: #{_forward.1} parent=1 // pred_fallthru
      _
    // Predicated region
    $region42: #{_forward.1} parent=1 // pred_check
      _
    $region43: #{_forward.1} parent=1 // pred_check_branch
      %75 = sbr.rel (0) target = $region45
    $region44: #{_forward.1} parent=1 // pred_region
      %76 = dma.done [#allocation8], 16
    $region45: #{_forward.1} parent=1 // pred_fallthru
      _
    %v78 = vld [vmem:[%s0] sm:$0xff]
    %v79 = vpack.c.bf16 %v78, %v78
    %v80 = vld [vmem:[%s1] sm:$0xff]
    %v81 = vld [vmem:[%s1 + $0x8] sm:$0xff]
    %v82 = vld [vmem:[%s2] sm:$0x3]
    %v84 = vlaneseq
    %v85 = vshrl.u32 %v84, 7
    %v86 = vsub.s32 0, %v85
    %v87 = vrot.slane %v82, %v86
    %v88 = vlaneseq
    %v89 = vshrl.u32 %v88, 7
    %v90 = vsub.s32 1, %v89
    %v91 = vrot.slane %v82, %v90
    %v96 = vunpack.c.l.b16 %v80
    %v97 = vunpack.c.h.b16 %v80
    %v98 = vunpack.c.l.b16 %v81
    %v99 = vunpack.c.h.b16 %v81
    %v100 = vpack.c.b16 %v98, %v96
    %v101 = vpack.c.b16 %v99, %v97
    %vm104 = vcmask 130048
    %v106 = vsel %vm104, %v79, 0
    %108 = vmatprep.subr.bf16.mxu0 0
    %109 = vmatpush1.bf16.msra.mxu0 0
    %110 = vmatprep.subr.bf16.mxu0 0
    %111 = vmatpush1.bf16.msra.mxu0 0
    %112 = vmatprep.subr.bf16.mxu0 0
    %113 = vmatpush1.bf16.msra.mxu0 0
    %114 = vmatprep.subr.bf16.mxu0 0
    %115 = vmatpush1.bf16.msra.mxu0 0
    %116 = vmatprep.subr.bf16.mxu0 0
    %117 = vmatpush1.bf16.msra.mxu0 0
    %118 = vmatprep.subr.bf16.mxu0 0
    %119 = vmatpush1.bf16.msra.mxu0 0
    %120 = vmatprep.subr.bf16.mxu0 0
    %121 = vmatpush1.bf16.msra.mxu0 0
    %122 = vmatprep.subr.bf16.mxu0 %v101
    %123 = vmatpush1.bf16.msra.mxu0 %v100
    %124 = vmatprep.subr.bf16.mxu0 0
    %125 = vmatpush2.bf16.msra.mxu0 0
    %126 = vmatprep.subr.bf16.mxu0 0
    %127 = vmatpush2.bf16.msra.mxu0 0
    %128 = vmatprep.subr.bf16.mxu0 0
    %129 = vmatpush2.bf16.msra.mxu0 0
    %130 = vmatprep.subr.bf16.mxu0 0
    %131 = vmatpush2.bf16.msra.mxu0 0
    %132 = vmatprep.subr.bf16.mxu0 0
    %133 = vmatpush2.bf16.msra.mxu0 0
    %134 = vmatprep.subr.bf16.mxu0 0
    %135 = vmatpush2.bf16.msra.mxu0 0
    %136 = vmatprep.subr.bf16.mxu0 0
    %137 = vmatpush2.bf16.msra.mxu0 0
    %138 = vmatprep.subr.bf16.mxu0 0
    %139 = vmatpush2.bf16.msra.mxu0 0
    %140 = vmatprep.mubr.bf16.mxu0 0
    %141 = vmatmul.mubr.bf16.gmra.mxu0 %v106
    %v142 = vpop.f32.mrf.mxu0
    %v143 = vadd.f32 %v87, %v142
    %v144 = vpop.f32.mrf.mxu0
    %v145 = vadd.f32 %v91, %v144
    %v146 = vpop.f32.mrf.mxu0
    %v147 = vpop.f32.mrf.mxu0
    %148 = vdwg.mxu0
    %v149 = vmax.f32 %v143, 0.0
    %v150 = vmax.f32 %v145, 0.0
    %v151 = vpack.c.bf16 %v149, %v149
    %v152 = vpack.c.bf16 %v150, %v150
    %v153 = vld [vmem:[#allocation2] sm:$0xff]
    %v154 = vld [vmem:[#allocation2 + $0x8] sm:$0xff]
    %v155 = vld [vmem:[#allocation2 + $0x10] sm:$0xff]
    %v156 = vld [vmem:[#allocation2 + $0x18] sm:$0xff]
    %v157 = vld [vmem:[#allocation2 + $0x20] sm:$0xff]
    %v158 = vld [vmem:[#allocation2 + $0x28] sm:$0xff]
    %v159 = vld [vmem:[#allocation2 + $0x30] sm:$0xff]
    %v160 = vld [vmem:[#allocation2 + $0x38] sm:$0xff]
    %v161 = vld [vmem:[#allocation2 + $0x40] sm:$0xff]
    %v162 = vld [vmem:[#allocation2 + $0x48] sm:$0xff]
    %v163 = vld [vmem:[#allocation2 + $0x50] sm:$0xff]
    %v164 = vld [vmem:[#allocation2 + $0x58] sm:$0xff]
    %v165 = vld [vmem:[#allocation2 + $0x60] sm:$0xff]
    %v166 = vld [vmem:[#allocation2 + $0x68] sm:$0xff]
    %v167 = vld [vmem:[#allocation2 + $0x70] sm:$0xff]
    %v168 = vld [vmem:[#allocation2 + $0x78] sm:$0xff]
    %v169 = vld [vmem:[#allocation2 + $0x80] sm:$0xff]
    %v170 = vld [vmem:[#allocation2 + $0x88] sm:$0xff]
    %v171 = vld [vmem:[#allocation2 + $0x90] sm:$0xff]
    %v172 = vld [vmem:[#allocation2 + $0x98] sm:$0xff]
    %v173 = vld [vmem:[#allocation2 + $0xa0] sm:$0xff]
    %v174 = vld [vmem:[#allocation2 + $0xa8] sm:$0xff]
    %v175 = vld [vmem:[#allocation2 + $0xb0] sm:$0xff]
    %v176 = vld [vmem:[#allocation2 + $0xb8] sm:$0xff]
    %v177 = vld [vmem:[#allocation2 + $0xc0] sm:$0xff]
    %v178 = vld [vmem:[#allocation2 + $0xc8] sm:$0xff]
    %v179 = vld [vmem:[#allocation2 + $0xd0] sm:$0xff]
    %v180 = vld [vmem:[#allocation2 + $0xd8] sm:$0xff]
    %v181 = vld [vmem:[#allocation2 + $0xe0] sm:$0xff]
    %v182 = vld [vmem:[#allocation2 + $0xe8] sm:$0xff]
    %v183 = vld [vmem:[#allocation2 + $0xf0] sm:$0xff]
    %v184 = vld [vmem:[#allocation2 + $0xf8] sm:$0xff]
    %v185 = vld [vmem:[#allocation4] sm:$0x3]
    %v187 = vlaneseq
    %v188 = vshrl.u32 %v187, 7
    %v189 = vsub.s32 0, %v188
    %v190 = vrot.slane %v185, %v189
    %v191 = vlaneseq
    %v192 = vshrl.u32 %v191, 7
    %v193 = vsub.s32 1, %v192
    %v194 = vrot.slane %v185, %v193
    %v229 = vunpack.c.l.b16 %v153
    %v230 = vunpack.c.h.b16 %v153
    %v231 = vunpack.c.l.b16 %v154
    %v232 = vunpack.c.h.b16 %v154
    %v233 = vunpack.c.l.b16 %v155
    %v234 = vunpack.c.h.b16 %v155
    %v235 = vunpack.c.l.b16 %v156
    %v236 = vunpack.c.h.b16 %v156
    %v237 = vunpack.c.l.b16 %v157
    %v238 = vunpack.c.h.b16 %v157
    %v239 = vunpack.c.l.b16 %v158
    %v240 = vunpack.c.h.b16 %v158
    %v241 = vunpack.c.l.b16 %v159
    %v242 = vunpack.c.h.b16 %v159
    %v243 = vunpack.c.l.b16 %v160
    %v244 = vunpack.c.h.b16 %v160
    %v245 = vunpack.c.l.b16 %v161
    %v246 = vunpack.c.h.b16 %v161
    %v247 = vunpack.c.l.b16 %v162
    %v248 = vunpack.c.h.b16 %v162
    %v249 = vunpack.c.l.b16 %v163
    %v250 = vunpack.c.h.b16 %v163
    %v251 = vunpack.c.l.b16 %v164
    %v252 = vunpack.c.h.b16 %v164
    %v253 = vunpack.c.l.b16 %v165
    %v254 = vunpack.c.h.b16 %v165
    %v255 = vunpack.c.l.b16 %v166
    %v256 = vunpack.c.h.b16 %v166
    %v257 = vunpack.c.l.b16 %v167
    %v258 = vunpack.c.h.b16 %v167
    %v259 = vunpack.c.l.b16 %v168
    %v260 = vunpack.c.h.b16 %v168
    %v261 = vunpack.c.l.b16 %v169
    %v262 = vunpack.c.h.b16 %v169
    %v263 = vunpack.c.l.b16 %v170
    %v264 = vunpack.c.h.b16 %v170
    %v265 = vunpack.c.l.b16 %v171
    %v266 = vunpack.c.h.b16 %v171
    %v267 = vunpack.c.l.b16 %v172
    %v268 = vunpack.c.h.b16 %v172
    %v269 = vunpack.c.l.b16 %v173
    %v270 = vunpack.c.h.b16 %v173
    %v271 = vunpack.c.l.b16 %v174
    %v272 = vunpack.c.h.b16 %v174
    %v273 = vunpack.c.l.b16 %v175
    %v274 = vunpack.c.h.b16 %v175
    %v275 = vunpack.c.l.b16 %v176
    %v276 = vunpack.c.h.b16 %v176
    %v277 = vunpack.c.l.b16 %v177
    %v278 = vunpack.c.h.b16 %v177
    %v279 = vunpack.c.l.b16 %v178
    %v280 = vunpack.c.h.b16 %v178
    %v281 = vunpack.c.l.b16 %v179
    %v282 = vunpack.c.h.b16 %v179
    %v283 = vunpack.c.l.b16 %v180
    %v284 = vunpack.c.h.b16 %v180
    %v285 = vunpack.c.l.b16 %v181
    %v286 = vunpack.c.h.b16 %v181
    %v287 = vunpack.c.l.b16 %v182
    %v288 = vunpack.c.h.b16 %v182
    %v289 = vunpack.c.l.b16 %v183
    %v290 = vunpack.c.h.b16 %v183
    %v291 = vunpack.c.l.b16 %v184
    %v292 = vunpack.c.h.b16 %v184
    %v293 = vpack.c.b16 %v231, %v229
    %v294 = vpack.c.b16 %v232, %v230
    %v295 = vpack.c.b16 %v235, %v233
    %v296 = vpack.c.b16 %v236, %v234
    %v297 = vpack.c.b16 %v239, %v237
    %v298 = vpack.c.b16 %v240, %v238
    %v299 = vpack.c.b16 %v243, %v241
    %v300 = vpack.c.b16 %v244, %v242
    %v301 = vpack.c.b16 %v247, %v245
    %v302 = vpack.c.b16 %v248, %v246
    %v303 = vpack.c.b16 %v251, %v249
    %v304 = vpack.c.b16 %v252, %v250
    %v305 = vpack.c.b16 %v255, %v253
    %v306 = vpack.c.b16 %v256, %v254
    %v307 = vpack.c.b16 %v259, %v257
    %v308 = vpack.c.b16 %v260, %v258
    %v309 = vpack.c.b16 %v263, %v261
    %v310 = vpack.c.b16 %v264, %v262
    %v311 = vpack.c.b16 %v267, %v265
    %v312 = vpack.c.b16 %v268, %v266
    %v313 = vpack.c.b16 %v271, %v269
    %v314 = vpack.c.b16 %v272, %v270
    %v315 = vpack.c.b16 %v275, %v273
    %v316 = vpack.c.b16 %v276, %v274
    %v317 = vpack.c.b16 %v279, %v277
    %v318 = vpack.c.b16 %v280, %v278
    %v319 = vpack.c.b16 %v283, %v281
    %v320 = vpack.c.b16 %v284, %v282
    %v321 = vpack.c.b16 %v287, %v285
    %v322 = vpack.c.b16 %v288, %v286
    %v323 = vpack.c.b16 %v291, %v289
    %v324 = vpack.c.b16 %v292, %v290
    %357 = vmatprep.subr.bf16.mxu0 %v308
    %358 = vmatpush1.bf16.msra.mxu0 %v307
    %359 = vmatprep.subr.bf16.mxu0 %v306
    %360 = vmatpush1.bf16.msra.mxu0 %v305
    %361 = vmatprep.subr.bf16.mxu0 %v304
    %362 = vmatpush1.bf16.msra.mxu0 %v303
    %363 = vmatprep.subr.bf16.mxu0 %v302
    %364 = vmatpush1.bf16.msra.mxu0 %v301
    %365 = vmatprep.subr.bf16.mxu0 %v300
    %366 = vmatpush1.bf16.msra.mxu0 %v299
    %367 = vmatprep.subr.bf16.mxu0 %v298
    %368 = vmatpush1.bf16.msra.mxu0 %v297
    %369 = vmatprep.subr.bf16.mxu0 %v296
    %370 = vmatpush1.bf16.msra.mxu0 %v295
    %371 = vmatprep.subr.bf16.mxu0 %v294
    %372 = vmatpush1.bf16.msra.mxu0 %v293
    %373 = vmatprep.subr.bf16.mxu0 %v324
    %374 = vmatpush2.bf16.msra.mxu0 %v323
    %375 = vmatprep.subr.bf16.mxu0 %v322
    %376 = vmatpush2.bf16.msra.mxu0 %v321
    %377 = vmatprep.subr.bf16.mxu0 %v320
    %378 = vmatpush2.bf16.msra.mxu0 %v319
    %379 = vmatprep.subr.bf16.mxu0 %v318
    %380 = vmatpush2.bf16.msra.mxu0 %v317
    %381 = vmatprep.subr.bf16.mxu0 %v316
    %382 = vmatpush2.bf16.msra.mxu0 %v315
    %383 = vmatprep.subr.bf16.mxu0 %v314
    %384 = vmatpush2.bf16.msra.mxu0 %v313
    %385 = vmatprep.subr.bf16.mxu0 %v312
    %386 = vmatpush2.bf16.msra.mxu0 %v311
    %387 = vmatprep.subr.bf16.mxu0 %v310
    %388 = vmatpush2.bf16.msra.mxu0 %v309
    %389 = vmatprep.mubr.bf16.mxu0 %v152
    %390 = vmatmul.mubr.bf16.gmra.mxu0 %v151
    %v391 = vpop.f32.mrf.mxu0
    %v392 = vadd.f32 %v190, %v391
    %v393 = vpop.f32.mrf.mxu0
    %v394 = vadd.f32 %v194, %v393
    %v395 = vpop.f32.mrf.mxu0
    %v396 = vpop.f32.mrf.mxu0
    %397 = vdwg.mxu0
    %v398 = vmax.f32 %v392, 0.0
    %v399 = vmax.f32 %v394, 0.0
    %v400 = vpack.c.bf16 %v398, %v398
    %v401 = vpack.c.bf16 %v399, %v399
    %v402 = vld [vmem:[#allocation6] sm:$0xf]
    %v403 = vld [vmem:[#allocation6 + $0x4] sm:$0xf]
    %v404 = vld [vmem:[#allocation6 + $0x8] sm:$0xf]
    %v405 = vld [vmem:[#allocation6 + $0xc] sm:$0xf]
    %v406 = vld [vmem:[#allocation6 + $0x10] sm:$0xf]
    %v407 = vld [vmem:[#allocation6 + $0x14] sm:$0xf]
    %v408 = vld [vmem:[#allocation6 + $0x18] sm:$0xf]
    %v409 = vld [vmem:[#allocation6 + $0x1c] sm:$0xf]
    %v410 = vld [vmem:[#allocation6 + $0x20] sm:$0xf]
    %v411 = vld [vmem:[#allocation6 + $0x24] sm:$0xf]
    %v412 = vld [vmem:[#allocation6 + $0x28] sm:$0xf]
    %v413 = vld [vmem:[#allocation6 + $0x2c] sm:$0xf]
    %v414 = vld [vmem:[#allocation6 + $0x30] sm:$0xf]
    %v415 = vld [vmem:[#allocation6 + $0x34] sm:$0xf]
    %v416 = vld [vmem:[#allocation6 + $0x38] sm:$0xf]
    %v417 = vld [vmem:[#allocation6 + $0x3c] sm:$0xf]
    %v418 = vld [vmem:[#allocation6 + $0x40] sm:$0xf]
    %v419 = vld [vmem:[#allocation6 + $0x44] sm:$0xf]
    %v420 = vld [vmem:[#allocation6 + $0x48] sm:$0xf]
    %v421 = vld [vmem:[#allocation6 + $0x4c] sm:$0xf]
    %v422 = vld [vmem:[#allocation6 + $0x50] sm:$0xf]
    %v423 = vld [vmem:[#allocation6 + $0x54] sm:$0xf]
    %v424 = vld [vmem:[#allocation6 + $0x58] sm:$0xf]
    %v425 = vld [vmem:[#allocation6 + $0x5c] sm:$0xf]
    %v426 = vld [vmem:[#allocation6 + $0x60] sm:$0xf]
    %v427 = vld [vmem:[#allocation6 + $0x64] sm:$0xf]
    %v428 = vld [vmem:[#allocation6 + $0x68] sm:$0xf]
    %v429 = vld [vmem:[#allocation6 + $0x6c] sm:$0xf]
    %v430 = vld [vmem:[#allocation6 + $0x70] sm:$0xf]
    %v431 = vld [vmem:[#allocation6 + $0x74] sm:$0xf]
    %v432 = vld [vmem:[#allocation6 + $0x78] sm:$0xf]
    %v433 = vld [vmem:[#allocation6 + $0x7c] sm:$0xf]
    %v434 = vld [vmem:[#allocation7] sm:$0x1]
    %v436 = vlaneseq
    %v437 = vshrl.u32 %v436, 7
    %v438 = vsub.s32 0, %v437
    %v439 = vrot.slane %v434, %v438
    %v473 = vunpack.c.l.b16 %v402
    %v474 = vunpack.c.l.b16 %v403
    %v475 = vunpack.c.l.b16 %v404
    %v476 = vunpack.c.l.b16 %v405
    %v477 = vunpack.c.l.b16 %v406
    %v478 = vunpack.c.l.b16 %v407
    %v479 = vunpack.c.l.b16 %v408
    %v480 = vunpack.c.l.b16 %v409
    %v481 = vunpack.c.l.b16 %v410
    %v482 = vunpack.c.l.b16 %v411
    %v483 = vunpack.c.l.b16 %v412
    %v484 = vunpack.c.l.b16 %v413
    %v485 = vunpack.c.l.b16 %v414
    %v486 = vunpack.c.l.b16 %v415
    %v487 = vunpack.c.l.b16 %v416
    %v488 = vunpack.c.l.b16 %v417
    %v489 = vunpack.c.l.b16 %v418
    %v490 = vunpack.c.l.b16 %v419
    %v491 = vunpack.c.l.b16 %v420
    %v492 = vunpack.c.l.b16 %v421
    %v493 = vunpack.c.l.b16 %v422
    %v494 = vunpack.c.l.b16 %v423
    %v495 = vunpack.c.l.b16 %v424
    %v496 = vunpack.c.l.b16 %v425
    %v497 = vunpack.c.l.b16 %v426
    %v498 = vunpack.c.l.b16 %v427
    %v499 = vunpack.c.l.b16 %v428
    %v500 = vunpack.c.l.b16 %v429
    %v501 = vunpack.c.l.b16 %v430
    %v502 = vunpack.c.l.b16 %v431
    %v503 = vunpack.c.l.b16 %v432
    %v504 = vunpack.c.l.b16 %v433
    %v505 = vpack.c.b16 %v474, %v473
    %v506 = vpack.c.b16 %v476, %v475
    %v507 = vpack.c.b16 %v478, %v477
    %v508 = vpack.c.b16 %v480, %v479
    %v509 = vpack.c.b16 %v482, %v481
    %v510 = vpack.c.b16 %v484, %v483
    %v511 = vpack.c.b16 %v486, %v485
    %v512 = vpack.c.b16 %v488, %v487
    %v513 = vpack.c.b16 %v490, %v489
    %v514 = vpack.c.b16 %v492, %v491
    %v515 = vpack.c.b16 %v494, %v493
    %v516 = vpack.c.b16 %v496, %v495
    %v517 = vpack.c.b16 %v498, %v497
    %v518 = vpack.c.b16 %v500, %v499
    %v519 = vpack.c.b16 %v502, %v501
    %v520 = vpack.c.b16 %v504, %v503
    %537 = vmatprep.subr.bf16.mxu0 0
    %538 = vmatpush1.bf16.msra.mxu0 %v512
    %539 = vmatprep.subr.bf16.mxu0 0
    %540 = vmatpush1.bf16.msra.mxu0 %v511
    %541 = vmatprep.subr.bf16.mxu0 0
    %542 = vmatpush1.bf16.msra.mxu0 %v510
    %543 = vmatprep.subr.bf16.mxu0 0
    %544 = vmatpush1.bf16.msra.mxu0 %v509
    %545 = vmatprep.subr.bf16.mxu0 0
    %546 = vmatpush1.bf16.msra.mxu0 %v508
    %547 = vmatprep.subr.bf16.mxu0 0
    %548 = vmatpush1.bf16.msra.mxu0 %v507
    %549 = vmatprep.subr.bf16.mxu0 0
    %550 = vmatpush1.bf16.msra.mxu0 %v506
    %551 = vmatprep.subr.bf16.mxu0 0
    %552 = vmatpush1.bf16.msra.mxu0 %v505
    %553 = vmatprep.subr.bf16.mxu0 0
    %554 = vmatpush2.bf16.msra.mxu0 %v520
    %555 = vmatprep.subr.bf16.mxu0 0
    %556 = vmatpush2.bf16.msra.mxu0 %v519
    %557 = vmatprep.subr.bf16.mxu0 0
    %558 = vmatpush2.bf16.msra.mxu0 %v518
    %559 = vmatprep.subr.bf16.mxu0 0
    %560 = vmatpush2.bf16.msra.mxu0 %v517
    %561 = vmatprep.subr.bf16.mxu0 0
    %562 = vmatpush2.bf16.msra.mxu0 %v516
    %563 = vmatprep.subr.bf16.mxu0 0
    %564 = vmatpush2.bf16.msra.mxu0 %v515
    %565 = vmatprep.subr.bf16.mxu0 0
    %566 = vmatpush2.bf16.msra.mxu0 %v514
    %567 = vmatprep.subr.bf16.mxu0 0
    %568 = vmatpush2.bf16.msra.mxu0 %v513
    %569 = vmatprep.mubr.bf16.mxu0 %v401
    %570 = vmatmul.mubr.bf16.gmra.mxu0 %v400
    %v571 = vpop.f32.mrf.mxu0
    %v572 = vadd.f32 %v439, %v571
    %v573 = vpop.f32.mrf.mxu0
    %v574 = vpop.f32.mrf.mxu0
    %v575 = vpop.f32.mrf.mxu0
    %576 = vdwg.mxu0
    %v577 = vxor.u32 %v572, 2147483648
    %v578 = vmul.f32 %v577, 1.442695
    %v579 = vpow.pop %v578
    %v580 = vadd.f32 %v579, 1.0
    %v581 = vrcp.pop %v580
    %v582 = vmul.f32 1.0, %v581
    %v583 = vmul.f32 %v582, 2.0
    %584 = vst [vmem:[%s7] sm:$0xff] %v583
    // Predicated region
    $region46: #{_forward.1} parent=1 // pred_check
      _
    $region47: #{_forward.1} parent=1 // pred_check_branch
      %586 = sbr.rel (0) target = $region49
    $region48: #{_forward.1} parent=1 // pred_region
      _
    $region49: #{_forward.1} parent=1 // pred_fallthru
      _
    // Predicated region
    $region50: #{_forward.1} parent=1 // pred_check
      _
    $region51: #{_forward.1} parent=1 // pred_check_branch
      %588 = sbr.rel (0) target = $region53
    $region52: #{_forward.1} parent=1 // pred_region
      _
    $region53: #{_forward.1} parent=1 // pred_fallthru
      _
    %589 = vsyncpa [#allocation3], 1
    %590 = vsyncpa [#allocation5], 1
    %591 = vsyncpa [#allocation8], 1

</llo_original>
